<compile_context>
chip_gen: v7x
topology: tpu7x:2x2x1
jax: 0.10.0
libtpu: 0.0.40
codegen_flags: <defaults>
</compile_context>

<pallas_src>
import jax
import jax.numpy as jnp
from jax.experimental import pallas as pl
from jax.experimental.pallas import tpu as pltpu


def _attention_fusion_kernel(x_ref, w_ref, o_ref):
    # x_ref: (TB, N, D) VMEM block; w_ref: (1, D) VMEM (resident); o_ref: (TB, D) VMEM.
    TB, N, D = x_ref.shape
    w_row = w_ref[...]                                         # (1, D), lane-dense

    # Pass 1: scores[b, n] = sum_d x[b, n, d] * w[d].
    # Per-n (TB, D) slices keep every temporary 2-D and dense (never a full (TB,N,D)
    # f32 slab); the multiply stays in the input dtype (bf16 VPU on v6e/v7x) and the
    # lane reduction accumulates in f32.
    # NOTE: the Linear bias is a single scalar added to every score; softmax over n is
    # shift-invariant, so it cancels exactly and is intentionally omitted here.
    cols = []
    for n in range(N):  # N is a static (small) block dim -> unrolled at trace time
        xn = x_ref[:, n, :]                                    # (TB, D)
        cols.append(jnp.sum((xn * w_row).astype(jnp.float32),
                            axis=-1, keepdims=True))           # (TB, 1) f32
    scores = jnp.concatenate(cols, axis=-1)                    # (TB, N) f32

    # Numerically stable softmax over n (tiny (TB, N) working set; exp goes to the EUP).
    m = jnp.max(scores, axis=-1, keepdims=True)                # (TB, 1)
    e = jnp.exp(scores - m)                                    # (TB, N)
    denom = jnp.sum(e, axis=-1, keepdims=True)                 # (TB, 1)
    inv = 1.0 / denom           # exact divide over a (TB, 1) column: essentially free

    # Pass 2: fused[b, d] = sum_n e[b, n] * x[b, n, d], accumulated in f32 on (TB, D).
    fused = jnp.zeros((TB, D), jnp.float32)
    for n in range(N):
        xn = x_ref[:, n, :].astype(jnp.float32)                # (TB, D)
        fused = fused + e[:, n:n + 1] * xn

    # Normalization applied once to the (TB, D) result (TB*D muls, not TB*N*D).
    o_ref[...] = (fused * inv).astype(o_ref.dtype)


def _round_up(v, m):
    return ((v + m - 1) // m) * m


def _ceil_div(a, b):
    return (a + b - 1) // b


def _vmem_plan():
    """Generation-aware per-step tile budget and scoped-VMEM limit (bytes)."""
    cap = None
    try:
        info = pltpu.get_tpu_info()
        cap = getattr(info, "vmem_capacity_bytes", None)
    except Exception:
        cap = None
    if not cap:
        cap = 64 << 20  # conservative fallback: v7x physical VMEM
    # ~1/3 of physical VMEM for the double-buffered working set, 16..40 MiB.
    budget = max(16 << 20, min(cap // 3, 40 << 20))
    # Scoped-VMEM limit: budget + headroom, always below physical capacity.
    limit = min(cap - (8 << 20), budget + (16 << 20))
    return int(budget), int(limit)


def _choose_tb(B, N, D, itemsize, budget):
    # Per-row VMEM cost with the two-pass kernel (no full-slab f32 temporaries):
    #   double-buffered input slab + f32 accumulator / per-n temporaries
    #   + double-buffered output block + small score columns.
    per_row = (2 * N * D * itemsize      # 2x pipelined (TB, N, D) input
               + 4 * D * 4               # f32 accumulator + per-n f32 slice temps
               + 2 * D * itemsize        # 2x pipelined (TB, D) output
               + 16 * N)                 # scores / exp columns
    tb = max(8, (budget // max(per_row, 1)) // 8 * 8)
    tb = min(tb, 1024)                   # large tiles amortize the ~0.35us step cost
    b_pad8 = _round_up(B, 8)
    if b_pad8 <= tb:
        tb = b_pad8                      # whole (padded) batch in a single step
    elif _ceil_div(b_pad8, tb) < 4 and b_pad8 >= 4 * 128:
        # Keep >=4 grid steps (DMA/compute overlap + v7x's two TensorCores) as long
        # as tiles stay >=128 rows.
        tb = max(128, _round_up(_ceil_div(b_pad8, 4), 8))
    return int(tb)


def attention_fusion(x, weight, bias=None):
    """x: (B, N, D); weight: (1, D); bias: (1,) (cancels under softmax). Returns (B, D)."""
    B, N, D = x.shape
    if bias is not None:
        # The bias shortcut is exact only for a single scalar bias broadcast over n.
        assert bias.size == 1, "AttentionFusion expects nn.Linear(embed_dim, 1): scalar bias"
    del bias  # softmax over n is invariant to the scalar shift -> cancels exactly

    budget, vmem_limit = _vmem_plan()
    tb = _choose_tb(B, N, D, x.dtype.itemsize, budget)
    b_pad = _round_up(B, tb)
    if b_pad != B:
        # Zero rows -> zero scores -> uniform softmax -> zero fused rows; sliced off below.
        x = jnp.pad(x, ((0, b_pad - B), (0, 0), (0, 0)))

    w_row = weight.reshape(1, D).astype(x.dtype)

    isz = x.dtype.itemsize
    cost = pl.CostEstimate(
        flops=4 * b_pad * N * D + 8 * b_pad * N,
        transcendentals=b_pad * N,
        bytes_accessed=b_pad * N * D * isz + b_pad * D * isz + D * isz,
    )

    out = pl.pallas_call(
        _attention_fusion_kernel,
        out_shape=jax.ShapeDtypeStruct((b_pad, D), x.dtype),
        grid_spec=pltpu.PrefetchScalarGridSpec(
            num_scalar_prefetch=0,
            grid=(b_pad // tb,),
            in_specs=[
                pl.BlockSpec((tb, N, D), lambda i: (i, 0, 0)),   # x slab per TB rows
                pl.BlockSpec((1, D), lambda i: (0, 0)),          # weight row (resident)
            ],
            out_specs=pl.BlockSpec((tb, D), lambda i: (i, 0)),   # sublane-dense output
        ),
        compiler_params=pltpu.CompilerParams(
            dimension_semantics=("parallel",),
            vmem_limit_bytes=vmem_limit,
        ),
        cost_estimate=cost,
    )(x, w_row)
    return out[:B]


def attention_fusion_ref(x, weight, bias):
    """Pure-JAX reference mirroring the PyTorch module (bias included, full f32 math)."""
    scores = jnp.einsum("bnd,od->bno", x, weight,
                        precision=jax.lax.Precision.HIGHEST) + bias   # (B, N, 1)
    w = jax.nn.softmax(scores, axis=1)                                # softmax over n
    return jnp.sum(w * x, axis=1)                                     # (B, D)


if __name__ == "__main__":
    key = jax.random.PRNGKey(0)

    # Small shape matching the module layout (batch, n, embed_dim).
    B, N, D = 2, 8, 32
    kx, kw, kb = jax.random.split(key, 3)
    x = jax.random.normal(kx, (B, N, D), dtype=jnp.float32)
    weight = jax.random.normal(kw, (1, D), dtype=jnp.float32) * 0.1
    bias = jax.random.normal(kb, (1,), dtype=jnp.float32) * 0.1

    out = jax.block_until_ready(attention_fusion(x, weight, bias))
    ref = attention_fusion_ref(x, weight, bias)
    assert out.shape == (B, D)
    assert jnp.allclose(out, ref, atol=1e-3, rtol=1e-3), "mismatch vs reference (small)"

    # A second shape exercising batch padding and a lane-dense (D=128) output block.
    B2, N2, D2 = 200, 8, 128
    kx2, kw2, kb2 = jax.random.split(jax.random.PRNGKey(1), 3)
    x2 = jax.random.normal(kx2, (B2, N2, D2), dtype=jnp.float32)
    w2 = jax.random.normal(kw2, (1, D2), dtype=jnp.float32) * 0.1
    b2 = jax.random.normal(kb2, (1,), dtype=jnp.float32) * 0.1

    out2 = jax.block_until_ready(attention_fusion(x2, w2, b2))
    ref2 = attention_fusion_ref(x2, w2, b2)
    assert out2.shape == (B2, D2)
    assert jnp.allclose(out2, ref2, atol=1e-3, rtol=1e-3), "mismatch vs reference (tiled)"

    print("KERNEL_OK")
</pallas_src>

<mosaic_0001>
module attributes {stable_mosaic.version = 11 : i64} {
  func.func @_attention_fusion_kernel(%arg0: i32, %arg1: memref<8x8x32xf32, #tpu.memory_space<vmem>>, %arg2: memref<1x32xf32, #tpu.memory_space<vmem>>, %arg3: memref<8x32xf32, #tpu.memory_space<vmem>>) attributes {dimension_semantics = [#tpu.dimension_semantics<parallel>], iteration_bounds = array<i64: 1>, scalar_prefetch = 0 : i64, scratch_operands = 0 : i64, tpu.core_type = #tpu.core_type<tc>, window_params = [{transform_indices = @transform_0, window_bounds = array<i64: 8, 8, 32>}, {pipeline_mode = #tpu.pipeline_mode<synchronous>, transform_indices = @transform_1, window_bounds = array<i64: 1, 32>}, {transform_indices = @transform_2, window_bounds = array<i64: 8, 32>}]} {
    %c0 = arith.constant 0 : index
    %c0_0 = arith.constant 0 : index
    %0 = vector.load %arg2[%c0, %c0_0] : memref<1x32xf32, #tpu.memory_space<vmem>>, vector<1x32xf32>
    %c0_1 = arith.constant 0 : index
    %c0_2 = arith.constant 0 : index
    %c0_3 = arith.constant 0 : index
    %1 = vector.load %arg1[%c0_1, %c0_2, %c0_3] : memref<8x8x32xf32, #tpu.memory_space<vmem>>, vector<8x1x32xf32>
    %2 = vector.shape_cast %1 : vector<8x1x32xf32> to vector<8x32xf32>
    %3 = vector.broadcast %0 : vector<1x32xf32> to vector<8x32xf32>
    %4 = arith.mulf %2, %3 : vector<8x32xf32>
    %cst = arith.constant dense<0.000000e+00> : vector<8xf32>
    %5 = vector.multi_reduction <add>, %4, %cst [1] : vector<8x32xf32> to vector<8xf32>
    %6 = vector.shape_cast %5 : vector<8xf32> to vector<8x1xf32>
    %c0_4 = arith.constant 0 : index
    %c1 = arith.constant 1 : index
    %c0_5 = arith.constant 0 : index
    %7 = vector.load %arg1[%c0_4, %c1, %c0_5] : memref<8x8x32xf32, #tpu.memory_space<vmem>>, vector<8x1x32xf32>
    %8 = vector.shape_cast %7 : vector<8x1x32xf32> to vector<8x32xf32>
    %9 = vector.broadcast %0 : vector<1x32xf32> to vector<8x32xf32>
    %10 = arith.mulf %8, %9 : vector<8x32xf32>
    %cst_6 = arith.constant dense<0.000000e+00> : vector<8xf32>
    %11 = vector.multi_reduction <add>, %10, %cst_6 [1] : vector<8x32xf32> to vector<8xf32>
    %12 = vector.shape_cast %11 : vector<8xf32> to vector<8x1xf32>
    %c0_7 = arith.constant 0 : index
    %c2 = arith.constant 2 : index
    %c0_8 = arith.constant 0 : index
    %13 = vector.load %arg1[%c0_7, %c2, %c0_8] : memref<8x8x32xf32, #tpu.memory_space<vmem>>, vector<8x1x32xf32>
    %14 = vector.shape_cast %13 : vector<8x1x32xf32> to vector<8x32xf32>
    %15 = vector.broadcast %0 : vector<1x32xf32> to vector<8x32xf32>
    %16 = arith.mulf %14, %15 : vector<8x32xf32>
    %cst_9 = arith.constant dense<0.000000e+00> : vector<8xf32>
    %17 = vector.multi_reduction <add>, %16, %cst_9 [1] : vector<8x32xf32> to vector<8xf32>
    %18 = vector.shape_cast %17 : vector<8xf32> to vector<8x1xf32>
    %c0_10 = arith.constant 0 : index
    %c3 = arith.constant 3 : index
    %c0_11 = arith.constant 0 : index
    %19 = vector.load %arg1[%c0_10, %c3, %c0_11] : memref<8x8x32xf32, #tpu.memory_space<vmem>>, vector<8x1x32xf32>
    %20 = vector.shape_cast %19 : vector<8x1x32xf32> to vector<8x32xf32>
    %21 = vector.broadcast %0 : vector<1x32xf32> to vector<8x32xf32>
    %22 = arith.mulf %20, %21 : vector<8x32xf32>
    %cst_12 = arith.constant dense<0.000000e+00> : vector<8xf32>
    %23 = vector.multi_reduction <add>, %22, %cst_12 [1] : vector<8x32xf32> to vector<8xf32>
    %24 = vector.shape_cast %23 : vector<8xf32> to vector<8x1xf32>
    %c0_13 = arith.constant 0 : index
    %c4 = arith.constant 4 : index
    %c0_14 = arith.constant 0 : index
    %25 = vector.load %arg1[%c0_13, %c4, %c0_14] : memref<8x8x32xf32, #tpu.memory_space<vmem>>, vector<8x1x32xf32>
    %26 = vector.shape_cast %25 : vector<8x1x32xf32> to vector<8x32xf32>
    %27 = vector.broadcast %0 : vector<1x32xf32> to vector<8x32xf32>
    %28 = arith.mulf %26, %27 : vector<8x32xf32>
    %cst_15 = arith.constant dense<0.000000e+00> : vector<8xf32>
    %29 = vector.multi_reduction <add>, %28, %cst_15 [1] : vector<8x32xf32> to vector<8xf32>
    %30 = vector.shape_cast %29 : vector<8xf32> to vector<8x1xf32>
    %c0_16 = arith.constant 0 : index
    %c5 = arith.constant 5 : index
    %c0_17 = arith.constant 0 : index
    %31 = vector.load %arg1[%c0_16, %c5, %c0_17] : memref<8x8x32xf32, #tpu.memory_space<vmem>>, vector<8x1x32xf32>
    %32 = vector.shape_cast %31 : vector<8x1x32xf32> to vector<8x32xf32>
    %33 = vector.broadcast %0 : vector<1x32xf32> to vector<8x32xf32>
    %34 = arith.mulf %32, %33 : vector<8x32xf32>
    %cst_18 = arith.constant dense<0.000000e+00> : vector<8xf32>
    %35 = vector.multi_reduction <add>, %34, %cst_18 [1] : vector<8x32xf32> to vector<8xf32>
    %36 = vector.shape_cast %35 : vector<8xf32> to vector<8x1xf32>
    %c0_19 = arith.constant 0 : index
    %c6 = arith.constant 6 : index
    %c0_20 = arith.constant 0 : index
    %37 = vector.load %arg1[%c0_19, %c6, %c0_20] : memref<8x8x32xf32, #tpu.memory_space<vmem>>, vector<8x1x32xf32>
    %38 = vector.shape_cast %37 : vector<8x1x32xf32> to vector<8x32xf32>
    %39 = vector.broadcast %0 : vector<1x32xf32> to vector<8x32xf32>
    %40 = arith.mulf %38, %39 : vector<8x32xf32>
    %cst_21 = arith.constant dense<0.000000e+00> : vector<8xf32>
    %41 = vector.multi_reduction <add>, %40, %cst_21 [1] : vector<8x32xf32> to vector<8xf32>
    %42 = vector.shape_cast %41 : vector<8xf32> to vector<8x1xf32>
    %c0_22 = arith.constant 0 : index
    %c7 = arith.constant 7 : index
    %c0_23 = arith.constant 0 : index
    %43 = vector.load %arg1[%c0_22, %c7, %c0_23] : memref<8x8x32xf32, #tpu.memory_space<vmem>>, vector<8x1x32xf32>
    %44 = vector.shape_cast %43 : vector<8x1x32xf32> to vector<8x32xf32>
    %45 = vector.broadcast %0 : vector<1x32xf32> to vector<8x32xf32>
    %46 = arith.mulf %44, %45 : vector<8x32xf32>
    %cst_24 = arith.constant dense<0.000000e+00> : vector<8xf32>
    %47 = vector.multi_reduction <add>, %46, %cst_24 [1] : vector<8x32xf32> to vector<8xf32>
    %48 = vector.shape_cast %47 : vector<8xf32> to vector<8x1xf32>
    %49 = tpu.concatenate %6, %12, %18, %24, %30, %36, %42, %48 in 1 : vector<8x1xf32>, vector<8x1xf32>, vector<8x1xf32>, vector<8x1xf32>, vector<8x1xf32>, vector<8x1xf32>, vector<8x1xf32>, vector<8x1xf32> -> vector<8x8xf32>
    %cst_25 = arith.constant dense<0xFF800000> : vector<8xf32>
    %50 = vector.multi_reduction <maximumf>, %49, %cst_25 [1] : vector<8x8xf32> to vector<8xf32>
    %51 = vector.shape_cast %50 : vector<8xf32> to vector<8x1xf32>
    %52 = vector.broadcast %51 : vector<8x1xf32> to vector<8x8xf32>
    %53 = arith.subf %49, %52 : vector<8x8xf32>
    %54 = math.exp %53 : vector<8x8xf32>
    %cst_26 = arith.constant dense<0.000000e+00> : vector<8xf32>
    %55 = vector.multi_reduction <add>, %54, %cst_26 [1] : vector<8x8xf32> to vector<8xf32>
    %56 = vector.shape_cast %55 : vector<8xf32> to vector<8x1xf32>
    %cst_27 = arith.constant 1.000000e+00 : f32
    %57 = vector.broadcast %cst_27 : f32 to vector<8x1xf32>
    %58 = arith.divf %57, %56 : vector<8x1xf32>
    %cst_28 = arith.constant 0.000000e+00 : f32
    %59 = vector.broadcast %cst_28 : f32 to vector<8x32xf32>
    %c0_29 = arith.constant 0 : index
    %c0_30 = arith.constant 0 : index
    %c0_31 = arith.constant 0 : index
    %60 = vector.load %arg1[%c0_29, %c0_30, %c0_31] : memref<8x8x32xf32, #tpu.memory_space<vmem>>, vector<8x1x32xf32>
    %61 = vector.shape_cast %60 : vector<8x1x32xf32> to vector<8x32xf32>
    %62 = vector.extract_strided_slice %54 {offsets = [0, 0], sizes = [8, 1], strides = [1, 1]} : vector<8x8xf32> to vector<8x1xf32>
    %63 = vector.broadcast %62 : vector<8x1xf32> to vector<8x32xf32>
    %64 = arith.mulf %63, %61 : vector<8x32xf32>
    %65 = arith.addf %59, %64 : vector<8x32xf32>
    %c0_32 = arith.constant 0 : index
    %c1_33 = arith.constant 1 : index
    %c0_34 = arith.constant 0 : index
    %66 = vector.load %arg1[%c0_32, %c1_33, %c0_34] : memref<8x8x32xf32, #tpu.memory_space<vmem>>, vector<8x1x32xf32>
    %67 = vector.shape_cast %66 : vector<8x1x32xf32> to vector<8x32xf32>
    %68 = vector.extract_strided_slice %54 {offsets = [0, 1], sizes = [8, 1], strides = [1, 1]} : vector<8x8xf32> to vector<8x1xf32>
    %69 = vector.broadcast %68 : vector<8x1xf32> to vector<8x32xf32>
    %70 = arith.mulf %69, %67 : vector<8x32xf32>
    %71 = arith.addf %65, %70 : vector<8x32xf32>
    %c0_35 = arith.constant 0 : index
    %c2_36 = arith.constant 2 : index
    %c0_37 = arith.constant 0 : index
    %72 = vector.load %arg1[%c0_35, %c2_36, %c0_37] : memref<8x8x32xf32, #tpu.memory_space<vmem>>, vector<8x1x32xf32>
    %73 = vector.shape_cast %72 : vector<8x1x32xf32> to vector<8x32xf32>
    %74 = vector.extract_strided_slice %54 {offsets = [0, 2], sizes = [8, 1], strides = [1, 1]} : vector<8x8xf32> to vector<8x1xf32>
    %75 = vector.broadcast %74 : vector<8x1xf32> to vector<8x32xf32>
    %76 = arith.mulf %75, %73 : vector<8x32xf32>
    %77 = arith.addf %71, %76 : vector<8x32xf32>
    %c0_38 = arith.constant 0 : index
    %c3_39 = arith.constant 3 : index
    %c0_40 = arith.constant 0 : index
    %78 = vector.load %arg1[%c0_38, %c3_39, %c0_40] : memref<8x8x32xf32, #tpu.memory_space<vmem>>, vector<8x1x32xf32>
    %79 = vector.shape_cast %78 : vector<8x1x32xf32> to vector<8x32xf32>
    %80 = vector.extract_strided_slice %54 {offsets = [0, 3], sizes = [8, 1], strides = [1, 1]} : vector<8x8xf32> to vector<8x1xf32>
    %81 = vector.broadcast %80 : vector<8x1xf32> to vector<8x32xf32>
    %82 = arith.mulf %81, %79 : vector<8x32xf32>
    %83 = arith.addf %77, %82 : vector<8x32xf32>
    %c0_41 = arith.constant 0 : index
    %c4_42 = arith.constant 4 : index
    %c0_43 = arith.constant 0 : index
    %84 = vector.load %arg1[%c0_41, %c4_42, %c0_43] : memref<8x8x32xf32, #tpu.memory_space<vmem>>, vector<8x1x32xf32>
    %85 = vector.shape_cast %84 : vector<8x1x32xf32> to vector<8x32xf32>
    %86 = vector.extract_strided_slice %54 {offsets = [0, 4], sizes = [8, 1], strides = [1, 1]} : vector<8x8xf32> to vector<8x1xf32>
    %87 = vector.broadcast %86 : vector<8x1xf32> to vector<8x32xf32>
    %88 = arith.mulf %87, %85 : vector<8x32xf32>
    %89 = arith.addf %83, %88 : vector<8x32xf32>
    %c0_44 = arith.constant 0 : index
    %c5_45 = arith.constant 5 : index
    %c0_46 = arith.constant 0 : index
    %90 = vector.load %arg1[%c0_44, %c5_45, %c0_46] : memref<8x8x32xf32, #tpu.memory_space<vmem>>, vector<8x1x32xf32>
    %91 = vector.shape_cast %90 : vector<8x1x32xf32> to vector<8x32xf32>
    %92 = vector.extract_strided_slice %54 {offsets = [0, 5], sizes = [8, 1], strides = [1, 1]} : vector<8x8xf32> to vector<8x1xf32>
    %93 = vector.broadcast %92 : vector<8x1xf32> to vector<8x32xf32>
    %94 = arith.mulf %93, %91 : vector<8x32xf32>
    %95 = arith.addf %89, %94 : vector<8x32xf32>
    %c0_47 = arith.constant 0 : index
    %c6_48 = arith.constant 6 : index
    %c0_49 = arith.constant 0 : index
    %96 = vector.load %arg1[%c0_47, %c6_48, %c0_49] : memref<8x8x32xf32, #tpu.memory_space<vmem>>, vector<8x1x32xf32>
    %97 = vector.shape_cast %96 : vector<8x1x32xf32> to vector<8x32xf32>
    %98 = vector.extract_strided_slice %54 {offsets = [0, 6], sizes = [8, 1], strides = [1, 1]} : vector<8x8xf32> to vector<8x1xf32>
    %99 = vector.broadcast %98 : vector<8x1xf32> to vector<8x32xf32>
    %100 = arith.mulf %99, %97 : vector<8x32xf32>
    %101 = arith.addf %95, %100 : vector<8x32xf32>
    %c0_50 = arith.constant 0 : index
    %c7_51 = arith.constant 7 : index
    %c0_52 = arith.constant 0 : index
    %102 = vector.load %arg1[%c0_50, %c7_51, %c0_52] : memref<8x8x32xf32, #tpu.memory_space<vmem>>, vector<8x1x32xf32>
    %103 = vector.shape_cast %102 : vector<8x1x32xf32> to vector<8x32xf32>
    %104 = vector.extract_strided_slice %54 {offsets = [0, 7], sizes = [8, 1], strides = [1, 1]} : vector<8x8xf32> to vector<8x1xf32>
    %105 = vector.broadcast %104 : vector<8x1xf32> to vector<8x32xf32>
    %106 = arith.mulf %105, %103 : vector<8x32xf32>
    %107 = arith.addf %101, %106 : vector<8x32xf32>
    %108 = vector.broadcast %58 : vector<8x1xf32> to vector<8x32xf32>
    %109 = arith.mulf %107, %108 : vector<8x32xf32>
    %c0_53 = arith.constant 0 : index
    %c0_54 = arith.constant 0 : index
    %110 = vector.load %arg3[%c0_53, %c0_54] : memref<8x32xf32, #tpu.memory_space<vmem>>, vector<8x32xf32>
    tpu.vector_store %arg3[%c0_53, %c0_54], %109 {strides = array<i32>} : memref<8x32xf32, #tpu.memory_space<vmem>>, vector<8x32xf32>,
    return
  }
  func.func @transform_0(%arg0: i32) -> (i32, i32, i32) {
    %c0_i32 = arith.constant 0 : i32
    %c0_i32_0 = arith.constant 0 : i32
    %c0_i32_1 = arith.constant 0 : i32
    return %arg0, %c0_i32, %c0_i32_0 : i32, i32, i32
  }
  func.func @transform_1(%arg0: i32) -> (i32, i32) {
    %c0_i32 = arith.constant 0 : i32
    %c0_i32_0 = arith.constant 0 : i32
    %c0_i32_1 = arith.constant 0 : i32
    return %c0_i32, %c0_i32_0 : i32, i32
  }
  func.func @transform_2(%arg0: i32) -> (i32, i32) {
    %c0_i32 = arith.constant 0 : i32
    %c0_i32_0 = arith.constant 0 : i32
    return %arg0, %c0_i32 : i32, i32
  }
}

</mosaic_0001>

<llo_original>
// kernel: tpu_custom_call.1
$region0: #{tpu_custom_call.1}
  #allocation0 [shape = 'u32[]', space=smem, size = 0x4, offset = 0x4, fixed_abs, tag = 'smem constant byte address 0x4 - core index']
  #allocation1 [shape = 'u32[144,128]{1,0:T(1,128)}', space=vmem, size = 0x12000, scoped, tag = 'internal scratch']
  %s0 = inlined_call_operand.hbm [shape: f32[8,8,32], index: 0, kind: input, shape index: {}]
  %s1 = inlined_call_operand.vmem [shape: f32[1,32], index: 1, kind: input, shape index: {}]
  %s2 = inlined_call_operand.hbm [shape: f32[8,32], index: 2, kind: output, shape index: {}]
  %s3 = sld [smem:[#allocation0]]
  $region22: #{tpu_custom_call.1} parent=0
    _
  %s5 = ssub.s32 1, %s3
  %s6 = scalar_select 0, %s5, %s3
  $region1: #{tpu_custom_call.1} parent=0
    #allocation2 [shape = 'u8[32768]{0}', space=vmem, size = 0x8000, scoped, tag = 'input window, operand 0, single buffered']
    #allocation3 [shape = 's32[1]{0}', space=sflag, size = 0x4, scoped, tag = 'scoped memory for tpu_custom_call.1']
    #allocation4 [shape = 's32[1]{0}', space=sflag, size = 0x4, scoped, tag = 'scoped memory for tpu_custom_call.1']
    #allocation5 [shape = 'u8[4096]{0}', space=vmem, size = 0x1000, scoped, tag = 'output window, operand 0, single buffered']
    %7 = vsyncpa [#allocation3], 0
    %8 = vsyncpa [#allocation4], 0
    // Predicated region
    $region2: #{tpu_custom_call.1} parent=1 // pred_check
      _
    $region3: #{tpu_custom_call.1} parent=1 // pred_check_branch
      %10 = sbr.rel (0) target = $region5
    $region4: #{tpu_custom_call.1} parent=1 // pred_region
      %s12 = ssub.s32 1024, 1024
      %13 = vsyncadd [#allocation3], %s12
      %s14 = sshll.u32 [#allocation2], 4
      %s15 = int_to_ptr.vmem [resolvable:$true] %s14
      %20 = dma.hbm_to_vmem [thread:$0]  %s0, 1024, %s15, [#allocation3], 128, 128, 8
    $region5: #{tpu_custom_call.1} parent=1 // pred_fallthru
      _
    // Predicated region
    $region6: #{tpu_custom_call.1} parent=1 // pred_check
      _
    $region7: #{tpu_custom_call.1} parent=1 // pred_check_branch
      %22 = sbr.rel (0) target = $region9
    $region8: #{tpu_custom_call.1} parent=1 // pred_region
      _
    $region9: #{tpu_custom_call.1} parent=1 // pred_fallthru
      _
    // Predicated region
    $region10: #{tpu_custom_call.1} parent=1 // pred_check
      _
    $region11: #{tpu_custom_call.1} parent=1 // pred_check_branch
      %24 = sbr.rel (0) target = $region13
    $region12: #{tpu_custom_call.1} parent=1 // pred_region
      %25 = dma.done [#allocation3], 1024
    $region13: #{tpu_custom_call.1} parent=1 // pred_fallthru
      _
    %v26 = vld [vmem:[%s1] sm:$0x1]
    %v27 = vld [vmem:[#allocation2] sm:$0x1]
    %v28 = vld [vmem:[#allocation2 + $0x8] sm:$0x1]
    %v29 = vld [vmem:[#allocation2 + $0x10] sm:$0x1]
    %v30 = vld [vmem:[#allocation2 + $0x18] sm:$0x1]
    %v31 = vld [vmem:[#allocation2 + $0x20] sm:$0x1]
    %v32 = vld [vmem:[#allocation2 + $0x28] sm:$0x1]
    %v33 = vld [vmem:[#allocation2 + $0x30] sm:$0x1]
    %v34 = vld [vmem:[#allocation2 + $0x38] sm:$0x1]
    %v36 = vlaneseq
    %v37 = vshrl.u32 %v36, 7
    %v38 = vsub.s32 0, %v37
    %v39 = vrot.slane %v26, %v38
    %v41 = vmul.f32 %v27, %v39
    %v42 = vmul.f32 %v28, %v39
    %v43 = vmul.f32 %v29, %v39
    %v44 = vmul.f32 %v30, %v39
    %v45 = vmul.f32 %v31, %v39
    %v46 = vmul.f32 %v32, %v39
    %v47 = vmul.f32 %v33, %v39
    %v48 = vmul.f32 %v34, %v39
    %v57 = vrot.slane %v42, 7
    %vm58 = vcmask 1041409
    %v59 = vsel %vm58, %v57, %v41
    %v60 = vrot.slane %v43, 6
    %vm61 = vcmask 1042434
    %v62 = vsel %vm61, %v60, %v59
    %v63 = vrot.slane %v44, 5
    %vm64 = vcmask 1043459
    %v65 = vsel %vm64, %v63, %v62
    %v66 = vrot.slane %v45, 4
    %vm67 = vcmask 1044484
    %v68 = vsel %vm67, %v66, %v65
    %v69 = vrot.slane %v46, 3
    %vm70 = vcmask 1045509
    %v71 = vsel %vm70, %v69, %v68
    %v72 = vrot.slane %v47, 2
    %vm73 = vcmask 1046534
    %v74 = vsel %vm73, %v72, %v71
    %v75 = vrot.slane %v48, 1
    %vm76 = vcmask 1047559
    %v77 = vsel %vm76, %v75, %v74
    %vm79 = vcmask 261120
    %v80 = vsel %vm79, %v77, 0.0
    %81 = vadd.xlane.f32.xlu0 %v80
    %v82 = vpop.xlane.xlu0 %81
    %v83 = vld [vmem:[#allocation2 + $0x1] sm:$0x1]
    %v84 = vld [vmem:[#allocation2 + $0x9] sm:$0x1]
    %v85 = vld [vmem:[#allocation2 + $0x11] sm:$0x1]
    %v86 = vld [vmem:[#allocation2 + $0x19] sm:$0x1]
    %v87 = vld [vmem:[#allocation2 + $0x21] sm:$0x1]
    %v88 = vld [vmem:[#allocation2 + $0x29] sm:$0x1]
    %v89 = vld [vmem:[#allocation2 + $0x31] sm:$0x1]
    %v90 = vld [vmem:[#allocation2 + $0x39] sm:$0x1]
    %v91 = vmul.f32 %v83, %v39
    %v92 = vmul.f32 %v84, %v39
    %v93 = vmul.f32 %v85, %v39
    %v94 = vmul.f32 %v86, %v39
    %v95 = vmul.f32 %v87, %v39
    %v96 = vmul.f32 %v88, %v39
    %v97 = vmul.f32 %v89, %v39
    %v98 = vmul.f32 %v90, %v39
    %v107 = vrot.slane %v92, 7
    %v108 = vsel %vm58, %v107, %v91
    %v109 = vrot.slane %v93, 6
    %v110 = vsel %vm61, %v109, %v108
    %v111 = vrot.slane %v94, 5
    %v112 = vsel %vm64, %v111, %v110
    %v113 = vrot.slane %v95, 4
    %v114 = vsel %vm67, %v113, %v112
    %v115 = vrot.slane %v96, 3
    %v116 = vsel %vm70, %v115, %v114
    %v117 = vrot.slane %v97, 2
    %v118 = vsel %vm73, %v117, %v116
    %v119 = vrot.slane %v98, 1
    %v120 = vsel %vm76, %v119, %v118
    %v122 = vsel %vm79, %v120, 0.0
    %123 = vadd.xlane.f32.xlu0 %v122
    %v124 = vpop.xlane.xlu0 %123
    %v125 = vld [vmem:[#allocation2 + $0x2] sm:$0x1]
    %v126 = vld [vmem:[#allocation2 + $0xa] sm:$0x1]
    %v127 = vld [vmem:[#allocation2 + $0x12] sm:$0x1]
    %v128 = vld [vmem:[#allocation2 + $0x1a] sm:$0x1]
    %v129 = vld [vmem:[#allocation2 + $0x22] sm:$0x1]
    %v130 = vld [vmem:[#allocation2 + $0x2a] sm:$0x1]
    %v131 = vld [vmem:[#allocation2 + $0x32] sm:$0x1]
    %v132 = vld [vmem:[#allocation2 + $0x3a] sm:$0x1]
    %v133 = vmul.f32 %v125, %v39
    %v134 = vmul.f32 %v126, %v39
    %v135 = vmul.f32 %v127, %v39
    %v136 = vmul.f32 %v128, %v39
    %v137 = vmul.f32 %v129, %v39
    %v138 = vmul.f32 %v130, %v39
    %v139 = vmul.f32 %v131, %v39
    %v140 = vmul.f32 %v132, %v39
    %v149 = vrot.slane %v134, 7
    %v150 = vsel %vm58, %v149, %v133
    %v151 = vrot.slane %v135, 6
    %v152 = vsel %vm61, %v151, %v150
    %v153 = vrot.slane %v136, 5
    %v154 = vsel %vm64, %v153, %v152
    %v155 = vrot.slane %v137, 4
    %v156 = vsel %vm67, %v155, %v154
    %v157 = vrot.slane %v138, 3
    %v158 = vsel %vm70, %v157, %v156
    %v159 = vrot.slane %v139, 2
    %v160 = vsel %vm73, %v159, %v158
    %v161 = vrot.slane %v140, 1
    %v162 = vsel %vm76, %v161, %v160
    %v164 = vsel %vm79, %v162, 0.0
    %165 = vadd.xlane.f32.xlu0 %v164
    %v166 = vpop.xlane.xlu0 %165
    %v167 = vld [vmem:[#allocation2 + $0x3] sm:$0x1]
    %v168 = vld [vmem:[#allocation2 + $0xb] sm:$0x1]
    %v169 = vld [vmem:[#allocation2 + $0x13] sm:$0x1]
    %v170 = vld [vmem:[#allocation2 + $0x1b] sm:$0x1]
    %v171 = vld [vmem:[#allocation2 + $0x23] sm:$0x1]
    %v172 = vld [vmem:[#allocation2 + $0x2b] sm:$0x1]
    %v173 = vld [vmem:[#allocation2 + $0x33] sm:$0x1]
    %v174 = vld [vmem:[#allocation2 + $0x3b] sm:$0x1]
    %v175 = vmul.f32 %v167, %v39
    %v176 = vmul.f32 %v168, %v39
    %v177 = vmul.f32 %v169, %v39
    %v178 = vmul.f32 %v170, %v39
    %v179 = vmul.f32 %v171, %v39
    %v180 = vmul.f32 %v172, %v39
    %v181 = vmul.f32 %v173, %v39
    %v182 = vmul.f32 %v174, %v39
    %v191 = vrot.slane %v176, 7
    %v192 = vsel %vm58, %v191, %v175
    %v193 = vrot.slane %v177, 6
    %v194 = vsel %vm61, %v193, %v192
    %v195 = vrot.slane %v178, 5
    %v196 = vsel %vm64, %v195, %v194
    %v197 = vrot.slane %v179, 4
    %v198 = vsel %vm67, %v197, %v196
    %v199 = vrot.slane %v180, 3
    %v200 = vsel %vm70, %v199, %v198
    %v201 = vrot.slane %v181, 2
    %v202 = vsel %vm73, %v201, %v200
    %v203 = vrot.slane %v182, 1
    %v204 = vsel %vm76, %v203, %v202
    %v206 = vsel %vm79, %v204, 0.0
    %207 = vadd.xlane.f32.xlu0 %v206
    %v208 = vpop.xlane.xlu0 %207
    %v209 = vld [vmem:[#allocation2 + $0x4] sm:$0x1]
    %v210 = vld [vmem:[#allocation2 + $0xc] sm:$0x1]
    %v211 = vld [vmem:[#allocation2 + $0x14] sm:$0x1]
    %v212 = vld [vmem:[#allocation2 + $0x1c] sm:$0x1]
    %v213 = vld [vmem:[#allocation2 + $0x24] sm:$0x1]
    %v214 = vld [vmem:[#allocation2 + $0x2c] sm:$0x1]
    %v215 = vld [vmem:[#allocation2 + $0x34] sm:$0x1]
    %v216 = vld [vmem:[#allocation2 + $0x3c] sm:$0x1]
    %v217 = vmul.f32 %v209, %v39
    %v218 = vmul.f32 %v210, %v39
    %v219 = vmul.f32 %v211, %v39
    %v220 = vmul.f32 %v212, %v39
    %v221 = vmul.f32 %v213, %v39
    %v222 = vmul.f32 %v214, %v39
    %v223 = vmul.f32 %v215, %v39
    %v224 = vmul.f32 %v216, %v39
    %v233 = vrot.slane %v218, 7
    %v234 = vsel %vm58, %v233, %v217
    %v235 = vrot.slane %v219, 6
    %v236 = vsel %vm61, %v235, %v234
    %v237 = vrot.slane %v220, 5
    %v238 = vsel %vm64, %v237, %v236
    %v239 = vrot.slane %v221, 4
    %v240 = vsel %vm67, %v239, %v238
    %v241 = vrot.slane %v222, 3
    %v242 = vsel %vm70, %v241, %v240
    %v243 = vrot.slane %v223, 2
    %v244 = vsel %vm73, %v243, %v242
    %v245 = vrot.slane %v224, 1
    %v246 = vsel %vm76, %v245, %v244
    %v248 = vsel %vm79, %v246, 0.0
    %249 = vadd.xlane.f32.xlu0 %v248
    %v250 = vpop.xlane.xlu0 %249
    %v251 = vld [vmem:[#allocation2 + $0x5] sm:$0x1]
    %v252 = vld [vmem:[#allocation2 + $0xd] sm:$0x1]
    %v253 = vld [vmem:[#allocation2 + $0x15] sm:$0x1]
    %v254 = vld [vmem:[#allocation2 + $0x1d] sm:$0x1]
    %v255 = vld [vmem:[#allocation2 + $0x25] sm:$0x1]
    %v256 = vld [vmem:[#allocation2 + $0x2d] sm:$0x1]
    %v257 = vld [vmem:[#allocation2 + $0x35] sm:$0x1]
    %v258 = vld [vmem:[#allocation2 + $0x3d] sm:$0x1]
    %v259 = vmul.f32 %v251, %v39
    %v260 = vmul.f32 %v252, %v39
    %v261 = vmul.f32 %v253, %v39
    %v262 = vmul.f32 %v254, %v39
    %v263 = vmul.f32 %v255, %v39
    %v264 = vmul.f32 %v256, %v39
    %v265 = vmul.f32 %v257, %v39
    %v266 = vmul.f32 %v258, %v39
    %v275 = vrot.slane %v260, 7
    %v276 = vsel %vm58, %v275, %v259
    %v277 = vrot.slane %v261, 6
    %v278 = vsel %vm61, %v277, %v276
    %v279 = vrot.slane %v262, 5
    %v280 = vsel %vm64, %v279, %v278
    %v281 = vrot.slane %v263, 4
    %v282 = vsel %vm67, %v281, %v280
    %v283 = vrot.slane %v264, 3
    %v284 = vsel %vm70, %v283, %v282
    %v285 = vrot.slane %v265, 2
    %v286 = vsel %vm73, %v285, %v284
    %v287 = vrot.slane %v266, 1
    %v288 = vsel %vm76, %v287, %v286
    %v290 = vsel %vm79, %v288, 0.0
    %291 = vadd.xlane.f32.xlu0 %v290
    %v292 = vpop.xlane.xlu0 %291
    %v293 = vld [vmem:[#allocation2 + $0x6] sm:$0x1]
    %v294 = vld [vmem:[#allocation2 + $0xe] sm:$0x1]
    %v295 = vld [vmem:[#allocation2 + $0x16] sm:$0x1]
    %v296 = vld [vmem:[#allocation2 + $0x1e] sm:$0x1]
    %v297 = vld [vmem:[#allocation2 + $0x26] sm:$0x1]
    %v298 = vld [vmem:[#allocation2 + $0x2e] sm:$0x1]
    %v299 = vld [vmem:[#allocation2 + $0x36] sm:$0x1]
    %v300 = vld [vmem:[#allocation2 + $0x3e] sm:$0x1]
    %v301 = vmul.f32 %v293, %v39
    %v302 = vmul.f32 %v294, %v39
    %v303 = vmul.f32 %v295, %v39
    %v304 = vmul.f32 %v296, %v39
    %v305 = vmul.f32 %v297, %v39
    %v306 = vmul.f32 %v298, %v39
    %v307 = vmul.f32 %v299, %v39
    %v308 = vmul.f32 %v300, %v39
    %v317 = vrot.slane %v302, 7
    %v318 = vsel %vm58, %v317, %v301
    %v319 = vrot.slane %v303, 6
    %v320 = vsel %vm61, %v319, %v318
    %v321 = vrot.slane %v304, 5
    %v322 = vsel %vm64, %v321, %v320
    %v323 = vrot.slane %v305, 4
    %v324 = vsel %vm67, %v323, %v322
    %v325 = vrot.slane %v306, 3
    %v326 = vsel %vm70, %v325, %v324
    %v327 = vrot.slane %v307, 2
    %v328 = vsel %vm73, %v327, %v326
    %v329 = vrot.slane %v308, 1
    %v330 = vsel %vm76, %v329, %v328
    %v332 = vsel %vm79, %v330, 0.0
    %333 = vadd.xlane.f32.xlu0 %v332
    %v334 = vpop.xlane.xlu0 %333
    %v335 = vld [vmem:[#allocation2 + $0x7] sm:$0x1]
    %v336 = vld [vmem:[#allocation2 + $0xf] sm:$0x1]
    %v337 = vld [vmem:[#allocation2 + $0x17] sm:$0x1]
    %v338 = vld [vmem:[#allocation2 + $0x1f] sm:$0x1]
    %v339 = vld [vmem:[#allocation2 + $0x27] sm:$0x1]
    %v340 = vld [vmem:[#allocation2 + $0x2f] sm:$0x1]
    %v341 = vld [vmem:[#allocation2 + $0x37] sm:$0x1]
    %v342 = vld [vmem:[#allocation2 + $0x3f] sm:$0x1]
    %v343 = vmul.f32 %v335, %v39
    %v344 = vmul.f32 %v336, %v39
    %v345 = vmul.f32 %v337, %v39
    %v346 = vmul.f32 %v338, %v39
    %v347 = vmul.f32 %v339, %v39
    %v348 = vmul.f32 %v340, %v39
    %v349 = vmul.f32 %v341, %v39
    %v350 = vmul.f32 %v342, %v39
    %v359 = vrot.slane %v344, 7
    %v360 = vsel %vm58, %v359, %v343
    %v361 = vrot.slane %v345, 6
    %v362 = vsel %vm61, %v361, %v360
    %v363 = vrot.slane %v346, 5
    %v364 = vsel %vm64, %v363, %v362
    %v365 = vrot.slane %v347, 4
    %v366 = vsel %vm67, %v365, %v364
    %v367 = vrot.slane %v348, 3
    %v368 = vsel %vm70, %v367, %v366
    %v369 = vrot.slane %v349, 2
    %v370 = vsel %vm73, %v369, %v368
    %v371 = vrot.slane %v350, 1
    %v372 = vsel %vm76, %v371, %v370
    %v374 = vsel %vm79, %v372, 0.0
    %375 = vadd.xlane.f32.xlu0 %v374
    %v376 = vpop.xlane.xlu0 %375
    %vm377 = vcmask 7168
    %v378 = vsel %vm377, %v82, %v124
    %vm379 = vcmask 15360
    %v380 = vsel %vm379, %v378, %v166
    %vm381 = vcmask 23552
    %v382 = vsel %vm381, %v380, %v208
    %vm383 = vcmask 31744
    %v384 = vsel %vm383, %v382, %v250
    %vm385 = vcmask 39936
    %v386 = vsel %vm385, %v384, %v292
    %vm387 = vcmask 48128
    %v388 = vsel %vm387, %v386, %v334
    %vm389 = vcmask 56320
    %v390 = vsel %vm389, %v388, %v376
    %vm391 = vcmask 64512
    %v392 = vsel %vm391, %v390, -inf
    %393 = vmax.xlane.f32.xlu0 %v392
    %v394 = vpop.xlane.xlu0 %393
    %v395 = vsub.f32 %v390, %v394
    %v396 = vmul.f32 %v395, 1.442695
    %v397 = vpow.pop %v396
    %v398 = vsel %vm391, %v397, 0.0
    %399 = vadd.xlane.f32.xlu0 %v398
    %v400 = vpop.xlane.xlu0 %399
    %v401 = vrcp.pop %v400
    %v402 = vmul.f32 1.0, %v401
    %404 = vset.pattern.permute.xlu0 0
    %405 = vperm.xlu0 %404, %v397
    %v406 = vpop.permute.xlu0 %405
    %v416 = vrot.slane %v28, 7
    %v417 = vsel %vm58, %v416, %v27
    %v418 = vrot.slane %v29, 6
    %v419 = vsel %vm61, %v418, %v417
    %v420 = vrot.slane %v30, 5
    %v421 = vsel %vm64, %v420, %v419
    %v422 = vrot.slane %v31, 4
    %v423 = vsel %vm67, %v422, %v421
    %v424 = vrot.slane %v32, 3
    %v425 = vsel %vm70, %v424, %v423
    %v426 = vrot.slane %v33, 2
    %v427 = vsel %vm73, %v426, %v425
    %v428 = vrot.slane %v34, 1
    %v429 = vsel %vm76, %v428, %v427
    %v431 = vmul.f32 %v406, %v429
    %v432 = vadd.f32 %v431, 0.0
    %433 = vset.pattern.permute.xlu0 1
    %434 = vperm.xlu0 %433, %v397
    %v435 = vpop.permute.xlu0 %434
    %v445 = vrot.slane %v84, 7
    %v446 = vsel %vm58, %v445, %v83
    %v447 = vrot.slane %v85, 6
    %v448 = vsel %vm61, %v447, %v446
    %v449 = vrot.slane %v86, 5
    %v450 = vsel %vm64, %v449, %v448
    %v451 = vrot.slane %v87, 4
    %v452 = vsel %vm67, %v451, %v450
    %v453 = vrot.slane %v88, 3
    %v454 = vsel %vm70, %v453, %v452
    %v455 = vrot.slane %v89, 2
    %v456 = vsel %vm73, %v455, %v454
    %v457 = vrot.slane %v90, 1
    %v458 = vsel %vm76, %v457, %v456
    %v460 = vmul.f32 %v435, %v458
    %v461 = vadd.f32 %v432, %v460
    %462 = vset.pattern.permute.xlu0 2
    %463 = vperm.xlu0 %462, %v397
    %v464 = vpop.permute.xlu0 %463
    %v474 = vrot.slane %v126, 7
    %v475 = vsel %vm58, %v474, %v125
    %v476 = vrot.slane %v127, 6
    %v477 = vsel %vm61, %v476, %v475
    %v478 = vrot.slane %v128, 5
    %v479 = vsel %vm64, %v478, %v477
    %v480 = vrot.slane %v129, 4
    %v481 = vsel %vm67, %v480, %v479
    %v482 = vrot.slane %v130, 3
    %v483 = vsel %vm70, %v482, %v481
    %v484 = vrot.slane %v131, 2
    %v485 = vsel %vm73, %v484, %v483
    %v486 = vrot.slane %v132, 1
    %v487 = vsel %vm76, %v486, %v485
    %v489 = vmul.f32 %v464, %v487
    %v490 = vadd.f32 %v461, %v489
    %491 = vset.pattern.permute.xlu0 3
    %492 = vperm.xlu0 %491, %v397
    %v493 = vpop.permute.xlu0 %492
    %v503 = vrot.slane %v168, 7
    %v504 = vsel %vm58, %v503, %v167
    %v505 = vrot.slane %v169, 6
    %v506 = vsel %vm61, %v505, %v504
    %v507 = vrot.slane %v170, 5
    %v508 = vsel %vm64, %v507, %v506
    %v509 = vrot.slane %v171, 4
    %v510 = vsel %vm67, %v509, %v508
    %v511 = vrot.slane %v172, 3
    %v512 = vsel %vm70, %v511, %v510
    %v513 = vrot.slane %v173, 2
    %v514 = vsel %vm73, %v513, %v512
    %v515 = vrot.slane %v174, 1
    %v516 = vsel %vm76, %v515, %v514
    %v518 = vmul.f32 %v493, %v516
    %v519 = vadd.f32 %v490, %v518
    %520 = vset.pattern.permute.xlu0 4
    %521 = vperm.xlu0 %520, %v397
    %v522 = vpop.permute.xlu0 %521
    %v532 = vrot.slane %v210, 7
    %v533 = vsel %vm58, %v532, %v209
    %v534 = vrot.slane %v211, 6
    %v535 = vsel %vm61, %v534, %v533
    %v536 = vrot.slane %v212, 5
    %v537 = vsel %vm64, %v536, %v535
    %v538 = vrot.slane %v213, 4
    %v539 = vsel %vm67, %v538, %v537
    %v540 = vrot.slane %v214, 3
    %v541 = vsel %vm70, %v540, %v539
    %v542 = vrot.slane %v215, 2
    %v543 = vsel %vm73, %v542, %v541
    %v544 = vrot.slane %v216, 1
    %v545 = vsel %vm76, %v544, %v543
    %v547 = vmul.f32 %v522, %v545
    %v548 = vadd.f32 %v519, %v547
    %549 = vset.pattern.permute.xlu0 5
    %550 = vperm.xlu0 %549, %v397
    %v551 = vpop.permute.xlu0 %550
    %v561 = vrot.slane %v252, 7
    %v562 = vsel %vm58, %v561, %v251
    %v563 = vrot.slane %v253, 6
    %v564 = vsel %vm61, %v563, %v562
    %v565 = vrot.slane %v254, 5
    %v566 = vsel %vm64, %v565, %v564
    %v567 = vrot.slane %v255, 4
    %v568 = vsel %vm67, %v567, %v566
    %v569 = vrot.slane %v256, 3
    %v570 = vsel %vm70, %v569, %v568
    %v571 = vrot.slane %v257, 2
    %v572 = vsel %vm73, %v571, %v570
    %v573 = vrot.slane %v258, 1
    %v574 = vsel %vm76, %v573, %v572
    %v576 = vmul.f32 %v551, %v574
    %v577 = vadd.f32 %v548, %v576
    %578 = vset.pattern.permute.xlu0 6
    %579 = vperm.xlu0 %578, %v397
    %v580 = vpop.permute.xlu0 %579
    %v590 = vrot.slane %v294, 7
    %v591 = vsel %vm58, %v590, %v293
    %v592 = vrot.slane %v295, 6
    %v593 = vsel %vm61, %v592, %v591
    %v594 = vrot.slane %v296, 5
    %v595 = vsel %vm64, %v594, %v593
    %v596 = vrot.slane %v297, 4
    %v597 = vsel %vm67, %v596, %v595
    %v598 = vrot.slane %v298, 3
    %v599 = vsel %vm70, %v598, %v597
    %v600 = vrot.slane %v299, 2
    %v601 = vsel %vm73, %v600, %v599
    %v602 = vrot.slane %v300, 1
    %v603 = vsel %vm76, %v602, %v601
    %v605 = vmul.f32 %v580, %v603
    %v606 = vadd.f32 %v577, %v605
    %607 = vset.pattern.permute.xlu0 7
    %608 = vperm.xlu0 %607, %v397
    %v609 = vpop.permute.xlu0 %608
    %v619 = vrot.slane %v336, 7
    %v620 = vsel %vm58, %v619, %v335
    %v621 = vrot.slane %v337, 6
    %v622 = vsel %vm61, %v621, %v620
    %v623 = vrot.slane %v338, 5
    %v624 = vsel %vm64, %v623, %v622
    %v625 = vrot.slane %v339, 4
    %v626 = vsel %vm67, %v625, %v624
    %v627 = vrot.slane %v340, 3
    %v628 = vsel %vm70, %v627, %v626
    %v629 = vrot.slane %v341, 2
    %v630 = vsel %vm73, %v629, %v628
    %v631 = vrot.slane %v342, 1
    %v632 = vsel %vm76, %v631, %v630
    %v634 = vmul.f32 %v609, %v632
    %v635 = vadd.f32 %v606, %v634
    %v636 = vmul.f32 %v635, %v402
    %637 = vst.msk [vmem:[#allocation5] sm:$0xff] %vm79, %v636
    // Predicated region
    $region14: #{tpu_custom_call.1} parent=1 // pred_check
      _
    $region15: #{tpu_custom_call.1} parent=1 // pred_check_branch
      %639 = sbr.rel (0) target = $region17
    $region16: #{tpu_custom_call.1} parent=1 // pred_region
      %s641 = ssub.s32 128, 128
      %642 = vsyncadd [#allocation4], %s641
      %s644 = sshll.u32 [#allocation5], 4
      %s645 = int_to_ptr.vmem [resolvable:$true] %s644
      %647 = dma.vmem_to_hbm [thread:$0]  %s645, 128, %s2, [#allocation4]
    $region17: #{tpu_custom_call.1} parent=1 // pred_fallthru
      _
    // Predicated region
    $region18: #{tpu_custom_call.1} parent=1 // pred_check
      _
    $region19: #{tpu_custom_call.1} parent=1 // pred_check_branch
      %649 = sbr.rel (0) target = $region21
    $region20: #{tpu_custom_call.1} parent=1 // pred_region
      %650 = dma.done [#allocation4], 128
    $region21: #{tpu_custom_call.1} parent=1 // pred_fallthru
      _
    %651 = vsyncpa [#allocation3], 1
    %652 = vsyncpa [#allocation4], 1

</llo_original>
